<compile_context>
chip_gen: v6e
topology: v6e:2x2x1
jax: 0.10.0
libtpu: 0.0.40
codegen_flags: <defaults>
</compile_context>

<pallas_src>
import functools

import jax
import jax.numpy as jnp
from jax.experimental import pallas as pl
from jax.experimental.pallas import tpu as pltpu


# ---------------------------------------------------------------------------
# Kernels
# ---------------------------------------------------------------------------
def _norm_tile(x, alpha, beta, eps):
    """LayerNorm math on one (TB, N, N) f32 tile; alpha/beta are (1, N) f32."""
    n = x.shape[-1]
    mean = jnp.mean(x, axis=-1, keepdims=True)                    # (TB, N, 1)
    centered = x - mean                                           # (TB, N, N)
    # torch.std default = unbiased estimator (Bessel correction, ddof=1)
    var = jnp.sum(centered * centered, axis=-1, keepdims=True) * (1.0 / (n - 1))
    std_t = jnp.swapaxes(jnp.sqrt(var), -2, -1)                   # (TB, 1, N)
    # Per-column scale with alpha folded in; small EUP reciprocal so the big
    # (TB, N, N) op is one multiply-add instead of a full-tile VPU divide.
    # approx=False keeps ~1 ulp parity with the true divide (1e-5 tolerance).
    scale = alpha * pl.reciprocal(std_t + eps, approx=False)      # (TB, 1, N)
    return centered * scale + beta


def _layer_norm_kernel(x_ref, alpha_ref, beta_ref, o_ref, *, eps):
    x = x_ref[...].astype(jnp.float32)                            # (TB, N, N)
    out = _norm_tile(x, alpha_ref[...], beta_ref[...], eps)
    o_ref[...] = out.astype(o_ref.dtype)


def _residual_layer_norm_kernel(x_ref, y_ref, alpha_ref, beta_ref, o_ref, *, eps):
    # Fused residual add + norm (post-norm path): norm(x + y), all in f32.
    s = x_ref[...].astype(jnp.float32) + y_ref[...].astype(jnp.float32)
    out = _norm_tile(s, alpha_ref[...], beta_ref[...], eps)
    o_ref[...] = out.astype(o_ref.dtype)


# ---------------------------------------------------------------------------
# Wrappers
# ---------------------------------------------------------------------------
def _round_up(v, m):
    return -(-v // m) * m


def layer_norm_pallas(x, alpha, beta, eps=1e-6, residual=None):
    """Batched LayerNorm, optionally fused with a residual add: norm(x + residual).

    x: (..., N, N).  Leading dims are flattened into a single batch axis; the
    kernel processes TB matrices per grid step (TB sized from real, lane-padded
    VMEM usage) so one pallas_call covers the whole slab with few fat steps.
    """
    orig_shape = x.shape
    N = orig_shape[-1]
    assert orig_shape[-2] == N, (
        "LayerNorm's std keepdim=False broadcast requires square last two dims")
    B = 1
    for d in orig_shape[:-2]:
        B *= d
    B = max(B, 1)

    inputs = [x.reshape(B, N, N)]
    if residual is not None:
        assert residual.shape == orig_shape
        inputs.append(residual.reshape(B, N, N))
    n_arrays = len(inputs) + 1                       # + output

    # --- VMEM accounting with (8, 128) tile padding of the last two dims ---
    per_mat = _round_up(N, 8) * _round_up(N, 128) * 4      # padded f32 slice
    per_b = n_arrays * 2 * per_mat                          # double-buffered

    try:
        vmem_cap = int(pltpu.get_tpu_info().vmem_capacity_bytes)
    except Exception:
        vmem_cap = 64 * 1024 * 1024                  # conservative (v7x-class)

    if vmem_cap <= 64 * 1024 * 1024:                 # v7x: 64 MiB per TC
        budget = 40 * 1024 * 1024
    else:                                            # v5e / v6e: 128 MiB
        budget = 96 * 1024 * 1024
    tb_max = max(1, min(budget // per_b, 1024))      # >~16 MiB blocks: no gain

    # Prefer >= 2 grid steps so megacore sharding (v7x, 2 TCs) has work for
    # both cores; on single-TC chips two steps cost < 1 us of overhead.
    num_blocks = max(pl.cdiv(B, tb_max), 2 if B >= 2 else 1)
    TB = pl.cdiv(B, num_blocks)
    Bp = num_blocks * TB
    if Bp != B:
        pad = Bp - B
        inputs = [jnp.pad(a, ((0, pad), (0, 0), (0, 0))) for a in inputs]

    alpha2 = alpha.reshape(1, N).astype(jnp.float32)
    beta2 = beta.reshape(1, N).astype(jnp.float32)

    mat_spec = pl.BlockSpec((TB, N, N), lambda b: (b, 0, 0))
    vec_spec = pl.BlockSpec((1, N), lambda b: (0, 0))        # resident params

    kernel_fn = (_residual_layer_norm_kernel if residual is not None
                 else _layer_norm_kernel)
    kernel = functools.partial(kernel_fn, eps=eps)

    # Scoped VMEM limit from the real double-buffered block footprint (+25%
    # headroom), never above physical VMEM minus compiler-scratch headroom.
    vmem_limit = int(min(max(32 * 1024 * 1024, per_b * TB * 5 // 4),
                         vmem_cap - 8 * 1024 * 1024))

    itemsize = jnp.dtype(x.dtype).itemsize
    cost = pl.CostEstimate(
        flops=int(5 * Bp * N * N),
        transcendentals=int(2 * Bp * N),
        bytes_accessed=int(n_arrays * Bp * N * N * itemsize),
    )

    out = pl.pallas_call(
        kernel,
        out_shape=jax.ShapeDtypeStruct((Bp, N, N), x.dtype),
        grid=(num_blocks,),
        in_specs=[mat_spec] * len(inputs) + [vec_spec, vec_spec],
        out_specs=mat_spec,
        compiler_params=pltpu.CompilerParams(
            dimension_semantics=("parallel",),       # independent matrices
            vmem_limit_bytes=vmem_limit,
        ),
        cost_estimate=cost,
    )(*inputs, alpha2, beta2)

    if Bp != B:
        out = out[:B]
    return out.reshape(orig_shape)


def sublayer_connection_pallas(x, sublayer_func, alpha, beta, eps=1e-6,
                               norm_first=False, dropout_p=0.0):
    """Forward of SublayerConnection using the Pallas LayerNorm kernels."""
    # TODO(synk): training-mode dropout (p > 0) is not implemented in-kernel;
    # eval-mode (identity) dropout is used, matching module.eval().
    del dropout_p
    if norm_first:
        # x + dropout(sublayer(norm(x)))
        return x + sublayer_func(layer_norm_pallas(x, alpha, beta, eps))
    # norm(x + dropout(sublayer(x)))  -- residual add fused into the norm kernel
    return layer_norm_pallas(x, alpha, beta, eps, residual=sublayer_func(x))


# ---------------------------------------------------------------------------
# Pure-JAX reference (identical torch broadcasting semantics, vmapped per-matrix)
# ---------------------------------------------------------------------------
def _layer_norm_ref2d(x, alpha, beta, eps):
    mean = jnp.mean(x, axis=-1, keepdims=True)
    std = jnp.std(x, axis=-1, ddof=1)            # keepdim=False, unbiased
    return alpha * (x - mean) / (std + eps) + beta


def layer_norm_ref(x, alpha, beta, eps=1e-6):
    x3 = x.reshape((-1, x.shape[-2], x.shape[-1]))
    out = jax.vmap(lambda m: _layer_norm_ref2d(m, alpha, beta, eps))(x3)
    return out.reshape(x.shape)


def sublayer_connection_ref(x, sublayer_func, alpha, beta, eps=1e-6,
                            norm_first=False):
    if norm_first:
        return x + sublayer_func(layer_norm_ref(x, alpha, beta, eps))
    return layer_norm_ref(x + sublayer_func(x), alpha, beta, eps)


if __name__ == "__main__":
    size = 32                                  # module's `size` (feature dim)
    key = jax.random.PRNGKey(0)
    kx, kw = jax.random.split(key)

    # (batch=2, heads=4, size, size): square last-two dims as required by the
    # module's own keepdim=False broadcast; leading dims are independent.
    x = jax.random.normal(kx, (2, 4, size, size), dtype=jnp.float32)

    # Deterministic parameters, matching nn.Parameter(torch.ones/zeros(size)).
    alpha = jnp.ones((size,), dtype=jnp.float32)
    beta = jnp.zeros((size,), dtype=jnp.float32)
    eps = 1e-6

    # Deterministic, shape-preserving sublayer: a simple linear map.
    w = jax.random.normal(kw, (size, size), dtype=jnp.float32) / jnp.sqrt(size)
    sublayer = lambda t: jnp.einsum("...ij,jk->...ik", t, w)

    for norm_first in (False, True):
        out = sublayer_connection_pallas(x, sublayer, alpha, beta, eps,
                                         norm_first=norm_first)
        out = jax.block_until_ready(out)
        ref = sublayer_connection_ref(x, sublayer, alpha, beta, eps,
                                      norm_first=norm_first)
        assert out.shape == ref.shape and out.dtype == ref.dtype
        assert jnp.allclose(out, ref, atol=1e-5, rtol=1e-5), (
            f"mismatch vs reference (norm_first={norm_first})")

    print("KERNEL_OK")
</pallas_src>

<mosaic_0001>
module attributes {stable_mosaic.version = 11 : i64} {
  func.func @_residual_layer_norm_kernel(%arg0: i32, %arg1: memref<4x32x32xf32, #tpu.memory_space<vmem>>, %arg2: memref<4x32x32xf32, #tpu.memory_space<vmem>>, %arg3: memref<1x32xf32, #tpu.memory_space<vmem>>, %arg4: memref<1x32xf32, #tpu.memory_space<vmem>>, %arg5: memref<4x32x32xf32, #tpu.memory_space<vmem>>) attributes {dimension_semantics = [#tpu.dimension_semantics<parallel>], iteration_bounds = array<i64: 2>, scalar_prefetch = 0 : i64, scratch_operands = 0 : i64, tpu.core_type = #tpu.core_type<tc>, window_params = [{transform_indices = @transform_0, window_bounds = array<i64: 4, 32, 32>}, {transform_indices = @transform_1, window_bounds = array<i64: 4, 32, 32>}, {pipeline_mode = #tpu.pipeline_mode<synchronous>, transform_indices = @transform_2, window_bounds = array<i64: 1, 32>}, {pipeline_mode = #tpu.pipeline_mode<synchronous>, transform_indices = @transform_3, window_bounds = array<i64: 1, 32>}, {transform_indices = @transform_4, window_bounds = array<i64: 4, 32, 32>}]} {
    %c0 = arith.constant 0 : index
    %c0_0 = arith.constant 0 : index
    %c0_1 = arith.constant 0 : index
    %0 = vector.load %arg1[%c0, %c0_0, %c0_1] : memref<4x32x32xf32, #tpu.memory_space<vmem>>, vector<4x32x32xf32>
    %c0_2 = arith.constant 0 : index
    %c0_3 = arith.constant 0 : index
    %c0_4 = arith.constant 0 : index
    %1 = vector.load %arg2[%c0_2, %c0_3, %c0_4] : memref<4x32x32xf32, #tpu.memory_space<vmem>>, vector<4x32x32xf32>
    %2 = arith.addf %0, %1 : vector<4x32x32xf32>
    %c0_5 = arith.constant 0 : index
    %c0_6 = arith.constant 0 : index
    %3 = vector.load %arg3[%c0_5, %c0_6] : memref<1x32xf32, #tpu.memory_space<vmem>>, vector<1x32xf32>
    %c0_7 = arith.constant 0 : index
    %c0_8 = arith.constant 0 : index
    %4 = vector.load %arg4[%c0_7, %c0_8] : memref<1x32xf32, #tpu.memory_space<vmem>>, vector<1x32xf32>
    %cst = arith.constant dense<0.000000e+00> : vector<4x32xf32>
    %5 = vector.multi_reduction <add>, %2, %cst [2] : vector<4x32x32xf32> to vector<4x32xf32>
    %6 = vector.shape_cast %5 : vector<4x32xf32> to vector<4x32x1xf32>
    %cst_9 = arith.constant 3.200000e+01 : f32
    %7 = vector.broadcast %cst_9 : f32 to vector<4x32x1xf32>
    %8 = arith.divf %6, %7 : vector<4x32x1xf32>
    %9 = vector.broadcast %8 : vector<4x32x1xf32> to vector<4x32x32xf32>
    %10 = arith.subf %2, %9 : vector<4x32x32xf32>
    %11 = arith.mulf %10, %10 : vector<4x32x32xf32>
    %cst_10 = arith.constant dense<0.000000e+00> : vector<4x32xf32>
    %12 = vector.multi_reduction <add>, %11, %cst_10 [2] : vector<4x32x32xf32> to vector<4x32xf32>
    %13 = vector.shape_cast %12 : vector<4x32xf32> to vector<4x32x1xf32>
    %cst_11 = arith.constant 0.0322580636 : f32
    %14 = vector.broadcast %cst_11 : f32 to vector<4x32x1xf32>
    %15 = arith.mulf %13, %14 : vector<4x32x1xf32>
    %16 = math.sqrt %15 : vector<4x32x1xf32>
    %17 = tpu.transpose %16, [0, 2, 1] : vector<4x32x1xf32> -> vector<4x1x32xf32>
    %cst_12 = arith.constant 9.99999997E-7 : f32
    %18 = vector.broadcast %cst_12 : f32 to vector<4x1x32xf32>
    %19 = arith.addf %17, %18 : vector<4x1x32xf32>
    %20 = tpu.reciprocal %19 : vector<4x1x32xf32> -> vector<4x1x32xf32>
    %21 = vector.shape_cast %3 : vector<1x32xf32> to vector<1x1x32xf32>
    %22 = vector.broadcast %21 : vector<1x1x32xf32> to vector<4x1x32xf32>
    %23 = arith.mulf %22, %20 : vector<4x1x32xf32>
    %24 = vector.broadcast %23 : vector<4x1x32xf32> to vector<4x32x32xf32>
    %25 = arith.mulf %10, %24 : vector<4x32x32xf32>
    %26 = vector.shape_cast %4 : vector<1x32xf32> to vector<1x1x32xf32>
    %27 = vector.broadcast %26 : vector<1x1x32xf32> to vector<4x32x32xf32>
    %28 = arith.addf %25, %27 : vector<4x32x32xf32>
    %c0_13 = arith.constant 0 : index
    %c0_14 = arith.constant 0 : index
    %c0_15 = arith.constant 0 : index
    %29 = vector.load %arg5[%c0_13, %c0_14, %c0_15] : memref<4x32x32xf32, #tpu.memory_space<vmem>>, vector<4x32x32xf32>
    tpu.vector_store %arg5[%c0_13, %c0_14, %c0_15], %28 {strides = array<i32>} : memref<4x32x32xf32, #tpu.memory_space<vmem>>, vector<4x32x32xf32>,
    return
  }
  func.func @transform_0(%arg0: i32) -> (i32, i32, i32) {
    %c0_i32 = arith.constant 0 : i32
    %c0_i32_0 = arith.constant 0 : i32
    %c0_i32_1 = arith.constant 0 : i32
    return %arg0, %c0_i32, %c0_i32_0 : i32, i32, i32
  }
  func.func @transform_1(%arg0: i32) -> (i32, i32, i32) {
    %c0_i32 = arith.constant 0 : i32
    %c0_i32_0 = arith.constant 0 : i32
    %c0_i32_1 = arith.constant 0 : i32
    return %arg0, %c0_i32, %c0_i32_0 : i32, i32, i32
  }
  func.func @transform_2(%arg0: i32) -> (i32, i32) {
    %c0_i32 = arith.constant 0 : i32
    %c0_i32_0 = arith.constant 0 : i32
    %c0_i32_1 = arith.constant 0 : i32
    return %c0_i32, %c0_i32_0 : i32, i32
  }
  func.func @transform_3(%arg0: i32) -> (i32, i32) {
    %c0_i32 = arith.constant 0 : i32
    %c0_i32_0 = arith.constant 0 : i32
    %c0_i32_1 = arith.constant 0 : i32
    return %c0_i32, %c0_i32_0 : i32, i32
  }
  func.func @transform_4(%arg0: i32) -> (i32, i32, i32) {
    %c0_i32 = arith.constant 0 : i32
    %c0_i32_0 = arith.constant 0 : i32
    %c0_i32_1 = arith.constant 0 : i32
    return %arg0, %c0_i32, %c0_i32_0 : i32, i32, i32
  }
}

</mosaic_0001>

<llo_original>
// kernel: tpu_custom_call.1
$region0: #{tpu_custom_call.1}
  #allocation0 [shape = 'u32[]', space=smem, size = 0x4, offset = 0x4, fixed_abs, tag = 'smem constant byte address 0x4 - core index']
  #allocation1 [shape = 'u32[144,128]{1,0:T(1,128)}', space=vmem, size = 0x12000, scoped, tag = 'internal scratch']
  %s0 = inlined_call_operand.hbm [shape: f32[8,32,32], index: 0, kind: input, shape index: {}]
  %s1 = inlined_call_operand.hbm [shape: f32[8,32,32], index: 1, kind: input, shape index: {}]
  %s2 = inlined_call_operand.vmem [shape: f32[1,32], index: 2, kind: input, shape index: {}]
  %s3 = inlined_call_operand.vmem [shape: f32[1,32], index: 3, kind: input, shape index: {}]
  %s4 = inlined_call_operand.hbm [shape: f32[8,32,32], index: 4, kind: output, shape index: {}]
  %s5 = sld [smem:[#allocation0]]
  $region57: #{tpu_custom_call.1} parent=0
    _
  %s7 = ssub.s32 1, %s5
  %s8 = scalar_select 0, %s7, %s5
  $region1: #{tpu_custom_call.1} parent=0
    #allocation2 [shape = 'u8[131072]{0}', space=vmem, size = 0x20000, scoped, tag = 'input window, operand 0']
    #allocation3 [shape = 's32[2]{0}', space=sflag, size = 0x8, scoped, tag = 'scoped memory for tpu_custom_call.1']
    #allocation4 [shape = 's32[2]{0}', space=sflag, size = 0x8, scoped, tag = 'scoped memory for tpu_custom_call.1']
    #allocation5 [shape = 'u8[131072]{0}', space=vmem, size = 0x20000, scoped, tag = 'input window, operand 1']
    #allocation6 [shape = 's32[2]{0}', space=sflag, size = 0x8, scoped, tag = 'scoped memory for tpu_custom_call.1']
    #allocation7 [shape = 'u8[131072]{0}', space=vmem, size = 0x20000, scoped, tag = 'output window, operand 0']
    %9 = vsyncpa [#allocation3], 0
    %s10 = scalar_lea.sflag [#allocation3], 1
    %11 = vsyncpa %s10, 0
    %12 = vsyncpa [#allocation6], 0
    %s13 = scalar_lea.sflag [#allocation6], 1
    %14 = vsyncpa %s13, 0
    %15 = vsyncpa [#allocation4], 0
    %s16 = scalar_lea.sflag [#allocation4], 1
    %17 = vsyncpa %s16, 0
    loop: start=0, step=1, limit=4
    $region2: #{tpu_custom_call.1} parent=1 // loop_pre_header
      _
    $region3: #{tpu_custom_call.1} parent=1 // loop_header
      %s19 = sphi 0, %s23
      %p20 = scmp.ge.s32.totalorder %s19, 4
      %s29 = sphi 0, %s31
      %s32 = sphi 0, %s29
      %s33 = sphi 0, %s32
      %s49 = sphi 0, %s33
      %s55 = sphi 0, %s57
      %s58 = sphi 0, %s55
      %s59 = sphi 0, %s58
      %s75 = sphi 0, %s59
      %s79 = sphi 0, %s79
      %s81 = sphi 0, %s79
      %s82 = sphi 0, %s81
      %s96 = sphi 0, %s82
      %s100 = sphi 0, %s100
      %s102 = sphi 0, %s100
      %s103 = sphi 0, %s102
      %s117 = sphi 0, %s103
      %s123 = sphi 0, %s125
      %s126 = sphi 0, %s123
      %s127 = sphi 0, %s126
      %s143 = sphi 0, %s127
    $region4: #{tpu_custom_call.1} parent=1 // loop_header_branch
      %22 = sbr.rel (%p20) target = $region8
    $region5: #{tpu_custom_call.1} parent=1 // loop_body
      %s24 = ssub.s32 %s19, 1
      %s25 = ssub.s32 %s19, 2
      %s26 = sadd.s32 %s19, 1
      %s27 = ssub.s32 %s19, %s26
      %p28 = scmp.eq.s32.totalorder %s27, 0
      %s30 = sadd.s32 %s29, 1
      %s31 = scalar_select %p28, %s29, %s30
      %p34 = pneg %p28
      %p35 = scmp.eq.s32.totalorder %s19, 1
      %p36 = por %p34, %p35
      %p37 = scmp.ne.s32.totalorder %s29, %s32
      %p38 = scmp.eq.s32.totalorder %s19, 0
      %p39 = por %p37, %p38
      %p40 = scmp.ne.s32.totalorder %s29, %s32
      %p41 = scmp.eq.s32.totalorder %s24, 1
      %p42 = por %p40, %p41
      %p43 = scmp.ne.s32.totalorder %s32, %s33
      %p44 = scmp.eq.s32.totalorder %s24, 0
      %p45 = por %p43, %p44
      %p46 = scmp.ne.s32.totalorder %s32, %s33
      %p47 = scmp.eq.s32.totalorder %s25, 1
      %p48 = por %p46, %p47
      %p50 = scmp.ne.s32.totalorder %s33, %s49
      %p51 = scmp.eq.s32.totalorder %s25, 0
      %p52 = por %p50, %p51
      %s53 = ssub.s32 %s19, %s26
      %p54 = scmp.eq.s32.totalorder %s53, 0
      %s56 = sadd.s32 %s55, 1
      %s57 = scalar_select %p54, %s55, %s56
      %p60 = pneg %p54
      %p61 = scmp.eq.s32.totalorder %s19, 1
      %p62 = por %p60, %p61
      %p63 = scmp.ne.s32.totalorder %s55, %s58
      %p64 = scmp.eq.s32.totalorder %s19, 0
      %p65 = por %p63, %p64
      %p66 = scmp.ne.s32.totalorder %s55, %s58
      %p67 = scmp.eq.s32.totalorder %s24, 1
      %p68 = por %p66, %p67
      %p69 = scmp.ne.s32.totalorder %s58, %s59
      %p70 = scmp.eq.s32.totalorder %s24, 0
      %p71 = por %p69, %p70
      %p72 = scmp.ne.s32.totalorder %s58, %s59
      %p73 = scmp.eq.s32.totalorder %s25, 1
      %p74 = por %p72, %p73
      %p76 = scmp.ne.s32.totalorder %s59, %s75
      %p77 = scmp.eq.s32.totalorder %s25, 0
      %p78 = por %p76, %p77
      %s80 = sadd.s32 %s79, 1
      %p83 = scmp.eq.s32.totalorder %s19, 1
      %p84 = scmp.ne.s32.totalorder %s79, %s81
      %p85 = scmp.eq.s32.totalorder %s19, 0
      %p86 = por %p84, %p85
      %p87 = scmp.ne.s32.totalorder %s79, %s81
      %p88 = scmp.eq.s32.totalorder %s24, 1
      %p89 = por %p87, %p88
      %p90 = scmp.ne.s32.totalorder %s81, %s82
      %p91 = scmp.eq.s32.totalorder %s24, 0
      %p92 = por %p90, %p91
      %p93 = scmp.ne.s32.totalorder %s81, %s82
      %p94 = scmp.eq.s32.totalorder %s25, 1
      %p95 = por %p93, %p94
      %p97 = scmp.ne.s32.totalorder %s82, %s96
      %p98 = scmp.eq.s32.totalorder %s25, 0
      %p99 = por %p97, %p98
      %s101 = sadd.s32 %s100, 1
      %p104 = scmp.eq.s32.totalorder %s19, 1
      %p105 = scmp.ne.s32.totalorder %s100, %s102
      %p106 = scmp.eq.s32.totalorder %s19, 0
      %p107 = por %p105, %p106
      %p108 = scmp.ne.s32.totalorder %s100, %s102
      %p109 = scmp.eq.s32.totalorder %s24, 1
      %p110 = por %p108, %p109
      %p111 = scmp.ne.s32.totalorder %s102, %s103
      %p112 = scmp.eq.s32.totalorder %s24, 0
      %p113 = por %p111, %p112
      %p114 = scmp.ne.s32.totalorder %s102, %s103
      %p115 = scmp.eq.s32.totalorder %s25, 1
      %p116 = por %p114, %p115
      %p118 = scmp.ne.s32.totalorder %s103, %s117
      %p119 = scmp.eq.s32.totalorder %s25, 0
      %p120 = por %p118, %p119
      %s121 = ssub.s32 %s19, %s26
      %p122 = scmp.eq.s32.totalorder %s121, 0
      %s124 = sadd.s32 %s123, 1
      %s125 = scalar_select %p122, %s123, %s124
      %p128 = pneg %p122
      %p129 = scmp.eq.s32.totalorder %s19, 1
      %p130 = por %p128, %p129
      %p131 = scmp.ne.s32.totalorder %s123, %s126
      %p132 = scmp.eq.s32.totalorder %s19, 0
      %p133 = por %p131, %p132
      %p134 = scmp.ne.s32.totalorder %s123, %s126
      %p135 = scmp.eq.s32.totalorder %s24, 1
      %p136 = por %p134, %p135
      %p137 = scmp.ne.s32.totalorder %s126, %s127
      %p138 = scmp.eq.s32.totalorder %s24, 0
      %p139 = por %p137, %p138
      %p140 = scmp.ne.s32.totalorder %s126, %s127
      %p141 = scmp.eq.s32.totalorder %s25, 1
      %p142 = por %p140, %p141
      %p144 = scmp.ne.s32.totalorder %s127, %s143
      %p145 = scmp.eq.s32.totalorder %s25, 0
      %p146 = por %p144, %p145
      %p147 = scmp.le.s32.totalorder 1, %s19
      %p148 = scmp.lt.s32.totalorder %s19, 3
      %p149 = pnand %p147, %p148
      %p150 = pneg %p149
      // Predicated region
      $region9: #{tpu_custom_call.1} parent=5 // pred_check
        _
      $region10: #{tpu_custom_call.1} parent=5 // pred_check_branch
        %152 = sbr.rel (%p149) target = $region12
      $region11: #{tpu_custom_call.1} parent=5 // pred_region
        %s153 = ssub.s32 %s19, 1
        // Predicated region
        $region13: #{tpu_custom_call.1} parent=11 // pred_check
          %p154 = pneg %p92
        $region14: #{tpu_custom_call.1} parent=11 // pred_check_branch
          %156 = sbr.rel (%p154) target = $region16
        $region15: #{tpu_custom_call.1} parent=11 // pred_region
          _
        $region16: #{tpu_custom_call.1} parent=11 // pred_fallthru
          _
        // Predicated region
        $region17: #{tpu_custom_call.1} parent=11 // pred_check
          %p157 = pneg %p113
        $region18: #{tpu_custom_call.1} parent=11 // pred_check_branch
          %159 = sbr.rel (%p157) target = $region20
        $region19: #{tpu_custom_call.1} parent=11 // pred_region
          _
        $region20: #{tpu_custom_call.1} parent=11 // pred_fallthru
          _
      $region12: #{tpu_custom_call.1} parent=5 // pred_fallthru
        _
      %p160 = scmp.lt.s32.totalorder %s19, 2
      // Predicated region
      $region21: #{tpu_custom_call.1} parent=5 // pred_check
        %p161 = pneg %p160
      $region22: #{tpu_custom_call.1} parent=5 // pred_check_branch
        %163 = sbr.rel (%p161) target = $region24
      $region23: #{tpu_custom_call.1} parent=5 // pred_region
        // Predicated region
        $region25: #{tpu_custom_call.1} parent=23 // pred_check
          %p164 = pneg %p39
        $region26: #{tpu_custom_call.1} parent=23 // pred_check_branch
          %166 = sbr.rel (%p164) target = $region28
        $region27: #{tpu_custom_call.1} parent=23 // pred_region
          %s167 = sand.u32 %s29, 1
          %s168 = scalar_lea.sflag [#allocation3], %s167
          %s169 = sand.u32 %s29, 1
          %s170 = smul.addr %s169, 128
          %s171 = scalar_lea.vmem [#allocation2], %s170
          %s172 = smul.u32 4, %s19
          %s174 = ssub.s32 2048, 2048
          %175 = vsyncadd %s168, %s174
          %s176 = smul.addr %s172, 4
          %s177 = smul.addr %s176, 128
          %s178 = scalar_lea.hbm %s0, %s177
          %s179 = sshll.u32 %s171, 4
          %s180 = int_to_ptr.vmem [resolvable:$true] %s179
          %185 = dma.hbm_to_vmem [thread:$0]  %s178, 2048, %s180, %s168, 128, 128, 8
        $region28: #{tpu_custom_call.1} parent=23 // pred_fallthru
          _
        // Predicated region
        $region29: #{tpu_custom_call.1} parent=23 // pred_check
          %p186 = pneg %p65
        $region30: #{tpu_custom_call.1} parent=23 // pred_check_branch
          %188 = sbr.rel (%p186) target = $region32
        $region31: #{tpu_custom_call.1} parent=23 // pred_region
          %s189 = sand.u32 %s55, 1
          %s190 = scalar_lea.sflag [#allocation6], %s189
          %s191 = sand.u32 %s55, 1
          %s192 = smul.addr %s191, 128
          %s193 = scalar_lea.vmem [#allocation5], %s192
          %s194 = smul.u32 4, %s19
          %s196 = ssub.s32 2048, 2048
          %197 = vsyncadd %s190, %s196
          %s198 = smul.addr %s194, 4
          %s199 = smul.addr %s198, 128
          %s200 = scalar_lea.hbm %s1, %s199
          %s201 = sshll.u32 %s193, 4
          %s202 = int_to_ptr.vmem [resolvable:$true] %s201
          %207 = dma.hbm_to_vmem [thread:$0]  %s200, 2048, %s202, %s190, 128, 128, 8
        $region32: #{tpu_custom_call.1} parent=23 // pred_fallthru
          _
      $region24: #{tpu_custom_call.1} parent=5 // pred_fallthru
        _
      %p208 = scmp.le.s32.totalorder 1, %s19
      %p209 = scmp.lt.s32.totalorder %s19, 3
      %p210 = pnand %p208, %p209
      %p211 = pneg %p210
      // Predicated region
      $region33: #{tpu_custom_call.1} parent=5 // pred_check
        _
      $region34: #{tpu_custom_call.1} parent=5 // pred_check_branch
        %213 = sbr.rel (%p210) target = $region36
      $region35: #{tpu_custom_call.1} parent=5 // pred_region
        %s214 = ssub.s32 %s19, 1
        %s215 = sand.u32 %s32, 1
        %s216 = scalar_lea.sflag [#allocation3], %s215
        %s217 = sand.u32 %s32, 1
        %s218 = smul.addr %s217, 128
        %s219 = scalar_lea.vmem [#allocation2], %s218
        // Predicated region
        $region37: #{tpu_custom_call.1} parent=35 // pred_check
          %p220 = pneg %p45
        $region38: #{tpu_custom_call.1} parent=35 // pred_check_branch
          %222 = sbr.rel (%p220) target = $region40
        $region39: #{tpu_custom_call.1} parent=35 // pred_region
          %223 = dma.done %s216, 2048
        $region40: #{tpu_custom_call.1} parent=35 // pred_fallthru
          _
        %s224 = sand.u32 %s58, 1
        %s225 = scalar_lea.sflag [#allocation6], %s224
        %s226 = sand.u32 %s58, 1
        %s227 = smul.addr %s226, 128
        %s228 = scalar_lea.vmem [#allocation5], %s227
        // Predicated region
        $region41: #{tpu_custom_call.1} parent=35 // pred_check
          %p229 = pneg %p71
        $region42: #{tpu_custom_call.1} parent=35 // pred_check_branch
          %231 = sbr.rel (%p229) target = $region44
        $region43: #{tpu_custom_call.1} parent=35 // pred_region
          %232 = dma.done %s225, 2048
        $region44: #{tpu_custom_call.1} parent=35 // pred_fallthru
          _
        %s233 = sand.u32 %s32, 1
        %s234 = scalar_lea.sflag [#allocation3], %s233
        %s235 = sand.u32 %s32, 1
        %s236 = smul.addr %s235, 128
        %s237 = scalar_lea.vmem [#allocation2], %s236
        %p238 = pneg %p45
        %p239 = pneg %p42
        %s240 = sand.u32 %s58, 1
        %s241 = scalar_lea.sflag [#allocation6], %s240
        %s242 = sand.u32 %s58, 1
        %s243 = smul.addr %s242, 128
        %s244 = scalar_lea.vmem [#allocation5], %s243
        %p245 = pneg %p71
        %p246 = pneg %p68
        %p247 = pneg %p92
        %p248 = pneg %p89
        %p249 = pneg %p113
        %p250 = pneg %p110
        %p251 = pneg %p139
        %p252 = pneg %p136
        %s253 = sand.u32 %s126, 1
        %s254 = scalar_lea.sflag [#allocation4], %s253
        %s255 = sand.u32 %s126, 1
        %s256 = smul.addr %s255, 128
        %s257 = scalar_lea.vmem [#allocation7], %s256
        %s258 = smul.u32 4, %s24
        %s259 = smul.u32 4, %s24
        %s260 = smul.u32 4, %s24
        %v261 = vld [vmem:[%s219] sm:$0xff]
        %v262 = vld [vmem:[%s219 + $0x8] sm:$0xff]
        %v263 = vld [vmem:[%s219 + $0x10] sm:$0xff]
        %v264 = vld [vmem:[%s219 + $0x18] sm:$0xff]
        %v265 = vld [vmem:[%s219 + $0x20] sm:$0xff]
        %v266 = vld [vmem:[%s219 + $0x28] sm:$0xff]
        %v267 = vld [vmem:[%s219 + $0x30] sm:$0xff]
        %v268 = vld [vmem:[%s219 + $0x38] sm:$0xff]
        %v269 = vld [vmem:[%s219 + $0x40] sm:$0xff]
        %v270 = vld [vmem:[%s219 + $0x48] sm:$0xff]
        %v271 = vld [vmem:[%s219 + $0x50] sm:$0xff]
        %v272 = vld [vmem:[%s219 + $0x58] sm:$0xff]
        %v273 = vld [vmem:[%s219 + $0x60] sm:$0xff]
        %v274 = vld [vmem:[%s219 + $0x68] sm:$0xff]
        %v275 = vld [vmem:[%s219 + $0x70] sm:$0xff]
        %v276 = vld [vmem:[%s219 + $0x78] sm:$0xff]
        %v277 = vld [vmem:[%s228] sm:$0xff]
        %v278 = vld [vmem:[%s228 + $0x8] sm:$0xff]
        %v279 = vld [vmem:[%s228 + $0x10] sm:$0xff]
        %v280 = vld [vmem:[%s228 + $0x18] sm:$0xff]
        %v281 = vld [vmem:[%s228 + $0x20] sm:$0xff]
        %v282 = vld [vmem:[%s228 + $0x28] sm:$0xff]
        %v283 = vld [vmem:[%s228 + $0x30] sm:$0xff]
        %v284 = vld [vmem:[%s228 + $0x38] sm:$0xff]
        %v285 = vld [vmem:[%s228 + $0x40] sm:$0xff]
        %v286 = vld [vmem:[%s228 + $0x48] sm:$0xff]
        %v287 = vld [vmem:[%s228 + $0x50] sm:$0xff]
        %v288 = vld [vmem:[%s228 + $0x58] sm:$0xff]
        %v289 = vld [vmem:[%s228 + $0x60] sm:$0xff]
        %v290 = vld [vmem:[%s228 + $0x68] sm:$0xff]
        %v291 = vld [vmem:[%s228 + $0x70] sm:$0xff]
        %v292 = vld [vmem:[%s228 + $0x78] sm:$0xff]
        %v293 = vadd.f32 %v261, %v277
        %v294 = vadd.f32 %v262, %v278
        %v295 = vadd.f32 %v263, %v279
        %v296 = vadd.f32 %v264, %v280
        %v297 = vadd.f32 %v265, %v281
        %v298 = vadd.f32 %v266, %v282
        %v299 = vadd.f32 %v267, %v283
        %v300 = vadd.f32 %v268, %v284
        %v301 = vadd.f32 %v269, %v285
        %v302 = vadd.f32 %v270, %v286
        %v303 = vadd.f32 %v271, %v287
        %v304 = vadd.f32 %v272, %v288
        %v305 = vadd.f32 %v273, %v289
        %v306 = vadd.f32 %v274, %v290
        %v307 = vadd.f32 %v275, %v291
        %v308 = vadd.f32 %v276, %v292
        %v309 = vld [vmem:[%s2] sm:$0x1]
        %v310 = vld [vmem:[%s3] sm:$0x1]
        %vm311 = vcmask 261120
        %v312 = vsel %vm311, %v293, 0.0
        %313 = vadd.xlane.f32.xlu0 %v312
        %v314 = vpop.xlane.xlu0 %313
        %v315 = vsel %vm311, %v294, 0.0
        %316 = vadd.xlane.f32.xlu0 %v315
        %v317 = vpop.xlane.xlu0 %316
        %v318 = vsel %vm311, %v295, 0.0
        %319 = vadd.xlane.f32.xlu0 %v318
        %v320 = vpop.xlane.xlu0 %319
        %v321 = vsel %vm311, %v296, 0.0
        %322 = vadd.xlane.f32.xlu0 %v321
        %v323 = vpop.xlane.xlu0 %322
        %v324 = vsel %vm311, %v297, 0.0
        %325 = vadd.xlane.f32.xlu0 %v324
        %v326 = vpop.xlane.xlu0 %325
        %v327 = vsel %vm311, %v298, 0.0
        %328 = vadd.xlane.f32.xlu0 %v327
        %v329 = vpop.xlane.xlu0 %328
        %v330 = vsel %vm311, %v299, 0.0
        %331 = vadd.xlane.f32.xlu0 %v330
        %v332 = vpop.xlane.xlu0 %331
        %v333 = vsel %vm311, %v300, 0.0
        %334 = vadd.xlane.f32.xlu0 %v333
        %v335 = vpop.xlane.xlu0 %334
        %v336 = vsel %vm311, %v301, 0.0
        %337 = vadd.xlane.f32.xlu0 %v336
        %v338 = vpop.xlane.xlu0 %337
        %v339 = vsel %vm311, %v302, 0.0
        %340 = vadd.xlane.f32.xlu0 %v339
        %v341 = vpop.xlane.xlu0 %340
        %v342 = vsel %vm311, %v303, 0.0
        %343 = vadd.xlane.f32.xlu0 %v342
        %v344 = vpop.xlane.xlu0 %343
        %v345 = vsel %vm311, %v304, 0.0
        %346 = vadd.xlane.f32.xlu0 %v345
        %v347 = vpop.xlane.xlu0 %346
        %v348 = vsel %vm311, %v305, 0.0
        %349 = vadd.xlane.f32.xlu0 %v348
        %v350 = vpop.xlane.xlu0 %349
        %v351 = vsel %vm311, %v306, 0.0
        %352 = vadd.xlane.f32.xlu0 %v351
        %v353 = vpop.xlane.xlu0 %352
        %v354 = vsel %vm311, %v307, 0.0
        %355 = vadd.xlane.f32.xlu0 %v354
        %v356 = vpop.xlane.xlu0 %355
        %v357 = vsel %vm311, %v308, 0.0
        %358 = vadd.xlane.f32.xlu0 %v357
        %v359 = vpop.xlane.xlu0 %358
        %v360 = vrcp.pop 32.0
        %v361 = vmul.f32 %v314, %v360
        %v362 = vmul.f32 %v317, %v360
        %v363 = vmul.f32 %v320, %v360
        %v364 = vmul.f32 %v323, %v360
        %v365 = vmul.f32 %v326, %v360
        %v366 = vmul.f32 %v329, %v360
        %v367 = vmul.f32 %v332, %v360
        %v368 = vmul.f32 %v335, %v360
        %v369 = vmul.f32 %v338, %v360
        %v370 = vmul.f32 %v341, %v360
        %v371 = vmul.f32 %v344, %v360
        %v372 = vmul.f32 %v347, %v360
        %v373 = vmul.f32 %v350, %v360
        %v374 = vmul.f32 %v353, %v360
        %v375 = vmul.f32 %v356, %v360
        %v376 = vmul.f32 %v359, %v360
        %v377 = vsub.f32 %v293, %v361
        %v378 = vsub.f32 %v294, %v362
        %v379 = vsub.f32 %v295, %v363
        %v380 = vsub.f32 %v296, %v364
        %v381 = vsub.f32 %v297, %v365
        %v382 = vsub.f32 %v298, %v366
        %v383 = vsub.f32 %v299, %v367
        %v384 = vsub.f32 %v300, %v368
        %v385 = vsub.f32 %v301, %v369
        %v386 = vsub.f32 %v302, %v370
        %v387 = vsub.f32 %v303, %v371
        %v388 = vsub.f32 %v304, %v372
        %v389 = vsub.f32 %v305, %v373
        %v390 = vsub.f32 %v306, %v374
        %v391 = vsub.f32 %v307, %v375
        %v392 = vsub.f32 %v308, %v376
        %v393 = vmul.f32 %v377, %v377
        %v394 = vmul.f32 %v378, %v378
        %v395 = vmul.f32 %v379, %v379
        %v396 = vmul.f32 %v380, %v380
        %v397 = vmul.f32 %v381, %v381
        %v398 = vmul.f32 %v382, %v382
        %v399 = vmul.f32 %v383, %v383
        %v400 = vmul.f32 %v384, %v384
        %v401 = vmul.f32 %v385, %v385
        %v402 = vmul.f32 %v386, %v386
        %v403 = vmul.f32 %v387, %v387
        %v404 = vmul.f32 %v388, %v388
        %v405 = vmul.f32 %v389, %v389
        %v406 = vmul.f32 %v390, %v390
        %v407 = vmul.f32 %v391, %v391
        %v408 = vmul.f32 %v392, %v392
        %v409 = vsel %vm311, %v393, 0.0
        %410 = vadd.xlane.f32.xlu0 %v409
        %v411 = vpop.xlane.xlu0 %410
        %v412 = vsel %vm311, %v394, 0.0
        %413 = vadd.xlane.f32.xlu0 %v412
        %v414 = vpop.xlane.xlu0 %413
        %v415 = vsel %vm311, %v395, 0.0
        %416 = vadd.xlane.f32.xlu0 %v415
        %v417 = vpop.xlane.xlu0 %416
        %v418 = vsel %vm311, %v396, 0.0
        %419 = vadd.xlane.f32.xlu0 %v418
        %v420 = vpop.xlane.xlu0 %419
        %v421 = vsel %vm311, %v397, 0.0
        %422 = vadd.xlane.f32.xlu0 %v421
        %v423 = vpop.xlane.xlu0 %422
        %v424 = vsel %vm311, %v398, 0.0
        %425 = vadd.xlane.f32.xlu0 %v424
        %v426 = vpop.xlane.xlu0 %425
        %v427 = vsel %vm311, %v399, 0.0
        %428 = vadd.xlane.f32.xlu0 %v427
        %v429 = vpop.xlane.xlu0 %428
        %v430 = vsel %vm311, %v400, 0.0
        %431 = vadd.xlane.f32.xlu0 %v430
        %v432 = vpop.xlane.xlu0 %431
        %v433 = vsel %vm311, %v401, 0.0
        %434 = vadd.xlane.f32.xlu0 %v433
        %v435 = vpop.xlane.xlu0 %434
        %v436 = vsel %vm311, %v402, 0.0
        %437 = vadd.xlane.f32.xlu0 %v436
        %v438 = vpop.xlane.xlu0 %437
        %v439 = vsel %vm311, %v403, 0.0
        %440 = vadd.xlane.f32.xlu0 %v439
        %v441 = vpop.xlane.xlu0 %440
        %v442 = vsel %vm311, %v404, 0.0
        %443 = vadd.xlane.f32.xlu0 %v442
        %v444 = vpop.xlane.xlu0 %443
        %v445 = vsel %vm311, %v405, 0.0
        %446 = vadd.xlane.f32.xlu0 %v445
        %v447 = vpop.xlane.xlu0 %446
        %v448 = vsel %vm311, %v406, 0.0
        %449 = vadd.xlane.f32.xlu0 %v448
        %v450 = vpop.xlane.xlu0 %449
        %v451 = vsel %vm311, %v407, 0.0
        %452 = vadd.xlane.f32.xlu0 %v451
        %v453 = vpop.xlane.xlu0 %452
        %v454 = vsel %vm311, %v408, 0.0
        %455 = vadd.xlane.f32.xlu0 %v454
        %v456 = vpop.xlane.xlu0 %455
        %v457 = vmul.f32 %v411, 0.032258064
        %v458 = vmul.f32 %v414, 0.032258064
        %v459 = vmul.f32 %v417, 0.032258064
        %v460 = vmul.f32 %v420, 0.032258064
        %v461 = vmul.f32 %v423, 0.032258064
        %v462 = vmul.f32 %v426, 0.032258064
        %v463 = vmul.f32 %v429, 0.032258064
        %v464 = vmul.f32 %v432, 0.032258064
        %v465 = vmul.f32 %v435, 0.032258064
        %v466 = vmul.f32 %v438, 0.032258064
        %v467 = vmul.f32 %v441, 0.032258064
        %v468 = vmul.f32 %v444, 0.032258064
        %v469 = vmul.f32 %v447, 0.032258064
        %v470 = vmul.f32 %v450, 0.032258064
        %v471 = vmul.f32 %v453, 0.032258064
        %v472 = vmul.f32 %v456, 0.032258064
        %v473 = vrsqrt.pop %v457
        %v474 = vmul.f32 %v457, %v473
        %vm475 = vcmp.eq.f32.partialorder %v457, inf
        %v476 = vsel %vm475, %v457, %v474
        %vm477 = vcmp.eq.f32.partialorder %v457, 0.0
        %v478 = vand.u32 %v457, 2147483648
        %v479 = vsel %vm477, %v478, %v476
        %v480 = vrsqrt.pop %v458
        %v481 = vmul.f32 %v458, %v480
        %vm482 = vcmp.eq.f32.partialorder %v458, inf
        %v483 = vsel %vm482, %v458, %v481
        %vm484 = vcmp.eq.f32.partialorder %v458, 0.0
        %v485 = vand.u32 %v458, 2147483648
        %v486 = vsel %vm484, %v485, %v483
        %v487 = vrsqrt.pop %v459
        %v488 = vmul.f32 %v459, %v487
        %vm489 = vcmp.eq.f32.partialorder %v459, inf
        %v490 = vsel %vm489, %v459, %v488
        %vm491 = vcmp.eq.f32.partialorder %v459, 0.0
        %v492 = vand.u32 %v459, 2147483648
        %v493 = vsel %vm491, %v492, %v490
        %v494 = vrsqrt.pop %v460
        %v495 = vmul.f32 %v460, %v494
        %vm496 = vcmp.eq.f32.partialorder %v460, inf
        %v497 = vsel %vm496, %v460, %v495
        %vm498 = vcmp.eq.f32.partialorder %v460, 0.0
        %v499 = vand.u32 %v460, 2147483648
        %v500 = vsel %vm498, %v499, %v497
        %v501 = vrsqrt.pop %v461
        %v502 = vmul.f32 %v461, %v501
        %vm503 = vcmp.eq.f32.partialorder %v461, inf
        %v504 = vsel %vm503, %v461, %v502
        %vm505 = vcmp.eq.f32.partialorder %v461, 0.0
        %v506 = vand.u32 %v461, 2147483648
        %v507 = vsel %vm505, %v506, %v504
        %v508 = vrsqrt.pop %v462
        %v509 = vmul.f32 %v462, %v508
        %vm510 = vcmp.eq.f32.partialorder %v462, inf
        %v511 = vsel %vm510, %v462, %v509
        %vm512 = vcmp.eq.f32.partialorder %v462, 0.0
        %v513 = vand.u32 %v462, 2147483648
        %v514 = vsel %vm512, %v513, %v511
        %v515 = vrsqrt.pop %v463
        %v516 = vmul.f32 %v463, %v515
        %vm517 = vcmp.eq.f32.partialorder %v463, inf
        %v518 = vsel %vm517, %v463, %v516
        %vm519 = vcmp.eq.f32.partialorder %v463, 0.0
        %v520 = vand.u32 %v463, 2147483648
        %v521 = vsel %vm519, %v520, %v518
        %v522 = vrsqrt.pop %v464
        %v523 = vmul.f32 %v464, %v522
        %vm524 = vcmp.eq.f32.partialorder %v464, inf
        %v525 = vsel %vm524, %v464, %v523
        %vm526 = vcmp.eq.f32.partialorder %v464, 0.0
        %v527 = vand.u32 %v464, 2147483648
        %v528 = vsel %vm526, %v527, %v525
        %v529 = vrsqrt.pop %v465
        %v530 = vmul.f32 %v465, %v529
        %vm531 = vcmp.eq.f32.partialorder %v465, inf
        %v532 = vsel %vm531, %v465, %v530
        %vm533 = vcmp.eq.f32.partialorder %v465, 0.0
        %v534 = vand.u32 %v465, 2147483648
        %v535 = vsel %vm533, %v534, %v532
        %v536 = vrsqrt.pop %v466
        %v537 = vmul.f32 %v466, %v536
        %vm538 = vcmp.eq.f32.partialorder %v466, inf
        %v539 = vsel %vm538, %v466, %v537
        %vm540 = vcmp.eq.f32.partialorder %v466, 0.0
        %v541 = vand.u32 %v466, 2147483648
        %v542 = vsel %vm540, %v541, %v539
        %v543 = vrsqrt.pop %v467
        %v544 = vmul.f32 %v467, %v543
        %vm545 = vcmp.eq.f32.partialorder %v467, inf
        %v546 = vsel %vm545, %v467, %v544
        %vm547 = vcmp.eq.f32.partialorder %v467, 0.0
        %v548 = vand.u32 %v467, 2147483648
        %v549 = vsel %vm547, %v548, %v546
        %v550 = vrsqrt.pop %v468
        %v551 = vmul.f32 %v468, %v550
        %vm552 = vcmp.eq.f32.partialorder %v468, inf
        %v553 = vsel %vm552, %v468, %v551
        %vm554 = vcmp.eq.f32.partialorder %v468, 0.0
        %v555 = vand.u32 %v468, 2147483648
        %v556 = vsel %vm554, %v555, %v553
        %v557 = vrsqrt.pop %v469
        %v558 = vmul.f32 %v469, %v557
        %vm559 = vcmp.eq.f32.partialorder %v469, inf
        %v560 = vsel %vm559, %v469, %v558
        %vm561 = vcmp.eq.f32.partialorder %v469, 0.0
        %v562 = vand.u32 %v469, 2147483648
        %v563 = vsel %vm561, %v562, %v560
        %v564 = vrsqrt.pop %v470
        %v565 = vmul.f32 %v470, %v564
        %vm566 = vcmp.eq.f32.partialorder %v470, inf
        %v567 = vsel %vm566, %v470, %v565
        %vm568 = vcmp.eq.f32.partialorder %v470, 0.0
        %v569 = vand.u32 %v470, 2147483648
        %v570 = vsel %vm568, %v569, %v567
        %v571 = vrsqrt.pop %v471
        %v572 = vmul.f32 %v471, %v571
        %vm573 = vcmp.eq.f32.partialorder %v471, inf
        %v574 = vsel %vm573, %v471, %v572
        %vm575 = vcmp.eq.f32.partialorder %v471, 0.0
        %v576 = vand.u32 %v471, 2147483648
        %v577 = vsel %vm575, %v576, %v574
        %v578 = vrsqrt.pop %v472
        %v579 = vmul.f32 %v472, %v578
        %vm580 = vcmp.eq.f32.partialorder %v472, inf
        %v581 = vsel %vm580, %v472, %v579
        %vm582 = vcmp.eq.f32.partialorder %v472, 0.0
        %v583 = vand.u32 %v472, 2147483648
        %v584 = vsel %vm582, %v583, %v581
        %585 = vxpose.xlu0.b32.start [1/16] %v479, 128
        %586 = vxpose.xlu0.b32.cont [2/16] %v486, 128
        %587 = vxpose.xlu0.b32.cont [3/16] %v493, 128
        %588 = vxpose.xlu0.b32.cont [4/16] %v500, 128
        %589 = vxpose.xlu0.b32.cont [5/16] 0.0, 128
        %590 = vxpose.xlu0.b32.cont [6/16] 0.0, 128
        %591 = vxpose.xlu0.b32.cont [7/16] 0.0, 128
        %592 = vxpose.xlu0.b32.cont [8/16] 0.0, 128
        %593 = vxpose.xlu0.b32.cont [9/16] 0.0, 128
        %594 = vxpose.xlu0.b32.cont [10/16] 0.0, 128
        %595 = vxpose.xlu0.b32.cont [11/16] 0.0, 128
        %596 = vxpose.xlu0.b32.cont [12/16] 0.0, 128
        %597 = vxpose.xlu0.b32.cont [13/16] 0.0, 128
        %598 = vxpose.xlu0.b32.cont [14/16] 0.0, 128
        %599 = vxpose.xlu0.b32.cont [15/16] 0.0, 128
        %600 = vxpose.xlu0.b32.end [16/16] 0.0, 128
        %v601 = vpop.trf.xlu0
        %v602 = vpop.trf.xlu0
        %v603 = vpop.trf.xlu0
        %v604 = vpop.trf.xlu0
        %v605 = vpop.trf.xlu0
        %v606 = vpop.trf.xlu0
        %v607 = vpop.trf.xlu0
        %v608 = vpop.trf.xlu0
        %v609 = vpop.trf.xlu0
        %v610 = vpop.trf.xlu0
        %v611 = vpop.trf.xlu0
        %v612 = vpop.trf.xlu0
        %v613 = vpop.trf.xlu0
        %v614 = vpop.trf.xlu0
        %v615 = vpop.trf.xlu0
        %v616 = vpop.trf.xlu0
        %617 = vxpose.xlu0.b32.start [1/16] %v507, 128
        %618 = vxpose.xlu0.b32.cont [2/16] %v514, 128
        %619 = vxpose.xlu0.b32.cont [3/16] %v521, 128
        %620 = vxpose.xlu0.b32.cont [4/16] %v528, 128
        %621 = vxpose.xlu0.b32.cont [5/16] 0.0, 128
        %622 = vxpose.xlu0.b32.cont [6/16] 0.0, 128
        %623 = vxpose.xlu0.b32.cont [7/16] 0.0, 128
        %624 = vxpose.xlu0.b32.cont [8/16] 0.0, 128
        %625 = vxpose.xlu0.b32.cont [9/16] 0.0, 128
        %626 = vxpose.xlu0.b32.cont [10/16] 0.0, 128
        %627 = vxpose.xlu0.b32.cont [11/16] 0.0, 128
        %628 = vxpose.xlu0.b32.cont [12/16] 0.0, 128
        %629 = vxpose.xlu0.b32.cont [13/16] 0.0, 128
        %630 = vxpose.xlu0.b32.cont [14/16] 0.0, 128
        %631 = vxpose.xlu0.b32.cont [15/16] 0.0, 128
        %632 = vxpose.xlu0.b32.end [16/16] 0.0, 128
        %v633 = vpop.trf.xlu0
        %v634 = vpop.trf.xlu0
        %v635 = vpop.trf.xlu0
        %v636 = vpop.trf.xlu0
        %v637 = vpop.trf.xlu0
        %v638 = vpop.trf.xlu0
        %v639 = vpop.trf.xlu0
        %v640 = vpop.trf.xlu0
        %v641 = vpop.trf.xlu0
        %v642 = vpop.trf.xlu0
        %v643 = vpop.trf.xlu0
        %v644 = vpop.trf.xlu0
        %v645 = vpop.trf.xlu0
        %v646 = vpop.trf.xlu0
        %v647 = vpop.trf.xlu0
        %v648 = vpop.trf.xlu0
        %649 = vxpose.xlu0.b32.start [1/16] %v535, 128
        %650 = vxpose.xlu0.b32.cont [2/16] %v542, 128
        %651 = vxpose.xlu0.b32.cont [3/16] %v549, 128
        %652 = vxpose.xlu0.b32.cont [4/16] %v556, 128
        %653 = vxpose.xlu0.b32.cont [5/16] 0.0, 128
        %654 = vxpose.xlu0.b32.cont [6/16] 0.0, 128
        %655 = vxpose.xlu0.b32.cont [7/16] 0.0, 128
        %656 = vxpose.xlu0.b32.cont [8/16] 0.0, 128
        %657 = vxpose.xlu0.b32.cont [9/16] 0.0, 128
        %658 = vxpose.xlu0.b32.cont [10/16] 0.0, 128
        %659 = vxpose.xlu0.b32.cont [11/16] 0.0, 128
        %660 = vxpose.xlu0.b32.cont [12/16] 0.0, 128
        %661 = vxpose.xlu0.b32.cont [13/16] 0.0, 128
        %662 = vxpose.xlu0.b32.cont [14/16] 0.0, 128
        %663 = vxpose.xlu0.b32.cont [15/16] 0.0, 128
        %664 = vxpose.xlu0.b32.end [16/16] 0.0, 128
        %v665 = vpop.trf.xlu0
        %v666 = vpop.trf.xlu0
        %v667 = vpop.trf.xlu0
        %v668 = vpop.trf.xlu0
        %v669 = vpop.trf.xlu0
        %v670 = vpop.trf.xlu0
        %v671 = vpop.trf.xlu0
        %v672 = vpop.trf.xlu0
        %v673 = vpop.trf.xlu0
        %v674 = vpop.trf.xlu0
        %v675 = vpop.trf.xlu0
        %v676 = vpop.trf.xlu0
        %v677 = vpop.trf.xlu0
        %v678 = vpop.trf.xlu0
        %v679 = vpop.trf.xlu0
        %v680 = vpop.trf.xlu0
        %681 = vxpose.xlu0.b32.start [1/16] %v563, 128
        %682 = vxpose.xlu0.b32.cont [2/16] %v570, 128
        %683 = vxpose.xlu0.b32.cont [3/16] %v577, 128
        %684 = vxpose.xlu0.b32.cont [4/16] %v584, 128
        %685 = vxpose.xlu0.b32.cont [5/16] 0.0, 128
        %686 = vxpose.xlu0.b32.cont [6/16] 0.0, 128
        %687 = vxpose.xlu0.b32.cont [7/16] 0.0, 128
        %688 = vxpose.xlu0.b32.cont [8/16] 0.0, 128
        %689 = vxpose.xlu0.b32.cont [9/16] 0.0, 128
        %690 = vxpose.xlu0.b32.cont [10/16] 0.0, 128
        %691 = vxpose.xlu0.b32.cont [11/16] 0.0, 128
        %692 = vxpose.xlu0.b32.cont [12/16] 0.0, 128
        %693 = vxpose.xlu0.b32.cont [13/16] 0.0, 128
        %694 = vxpose.xlu0.b32.cont [14/16] 0.0, 128
        %695 = vxpose.xlu0.b32.cont [15/16] 0.0, 128
        %696 = vxpose.xlu0.b32.end [16/16] 0.0, 128
        %v697 = vpop.trf.xlu0
        %v698 = vpop.trf.xlu0
        %v699 = vpop.trf.xlu0
        %v700 = vpop.trf.xlu0
        %v701 = vpop.trf.xlu0
        %v702 = vpop.trf.xlu0
        %v703 = vpop.trf.xlu0
        %v704 = vpop.trf.xlu0
        %v705 = vpop.trf.xlu0
        %v706 = vpop.trf.xlu0
        %v707 = vpop.trf.xlu0
        %v708 = vpop.trf.xlu0
        %v709 = vpop.trf.xlu0
        %v710 = vpop.trf.xlu0
        %v711 = vpop.trf.xlu0
        %v712 = vpop.trf.xlu0
        %v713 = vadd.f32 %v601, 1e-06
        %v714 = vadd.f32 %v633, 1e-06
        %v715 = vadd.f32 %v665, 1e-06
        %v716 = vadd.f32 %v697, 1e-06
        %v717 = vrcp.pop %v713
        %v718 = vrcp.pop %v714
        %v719 = vrcp.pop %v715
        %v720 = vrcp.pop %v716
        %v721 = vmul.f32 %v309, %v717
        %v722 = vmul.f32 %v309, %v718
        %v723 = vmul.f32 %v309, %v719
        %v724 = vmul.f32 %v309, %v720
        %v729 = vlaneseq
        %v730 = vshrl.u32 %v729, 7
        %v731 = vsub.s32 0, %v730
        %v732 = vrot.slane %v721, %v731
        %v733 = vlaneseq
        %v734 = vshrl.u32 %v733, 7
        %v735 = vsub.s32 0, %v734
        %v736 = vrot.slane %v722, %v735
        %v737 = vlaneseq
        %v738 = vshrl.u32 %v737, 7
        %v739 = vsub.s32 0, %v738
        %v740 = vrot.slane %v723, %v739
        %v741 = vlaneseq
        %v742 = vshrl.u32 %v741, 7
        %v743 = vsub.s32 0, %v742
        %v744 = vrot.slane %v724, %v743
        %v749 = vmul.f32 %v377, %v732
        %v750 = vmul.f32 %v378, %v732
        %v751 = vmul.f32 %v379, %v732
        %v752 = vmul.f32 %v380, %v732
        %v753 = vmul.f32 %v381, %v736
        %v754 = vmul.f32 %v382, %v736
        %v755 = vmul.f32 %v383, %v736
        %v756 = vmul.f32 %v384, %v736
        %v757 = vmul.f32 %v385, %v740
        %v758 = vmul.f32 %v386, %v740
        %v759 = vmul.f32 %v387, %v740
        %v760 = vmul.f32 %v388, %v740
        %v761 = vmul.f32 %v389, %v744
        %v762 = vmul.f32 %v390, %v744
        %v763 = vmul.f32 %v391, %v744
        %v764 = vmul.f32 %v392, %v744
        %v766 = vlaneseq
        %v767 = vshrl.u32 %v766, 7
        %v768 = vsub.s32 0, %v767
        %v769 = vrot.slane %v310, %v768
        %v771 = vadd.f32 %v749, %v769
        %v772 = vadd.f32 %v750, %v769
        %v773 = vadd.f32 %v751, %v769
        %v774 = vadd.f32 %v752, %v769
        %v775 = vadd.f32 %v753, %v769
        %v776 = vadd.f32 %v754, %v769
        %v777 = vadd.f32 %v755, %v769
        %v778 = vadd.f32 %v756, %v769
        %v779 = vadd.f32 %v757, %v769
        %v780 = vadd.f32 %v758, %v769
        %v781 = vadd.f32 %v759, %v769
        %v782 = vadd.f32 %v760, %v769
        %v783 = vadd.f32 %v761, %v769
        %v784 = vadd.f32 %v762, %v769
        %v785 = vadd.f32 %v763, %v769
        %v786 = vadd.f32 %v764, %v769
        %787 = vst.msk [vmem:[%s257] sm:$0xff] %vm311, %v771
        %788 = vst.msk [vmem:[%s257 + $0x8] sm:$0xff] %vm311, %v772
        %789 = vst.msk [vmem:[%s257 + $0x10] sm:$0xff] %vm311, %v773
        %790 = vst.msk [vmem:[%s257 + $0x18] sm:$0xff] %vm311, %v774
        %791 = vst.msk [vmem:[%s257 + $0x20] sm:$0xff] %vm311, %v775
        %792 = vst.msk [vmem:[%s257 + $0x28] sm:$0xff] %vm311, %v776
        %793 = vst.msk [vmem:[%s257 + $0x30] sm:$0xff] %vm311, %v777
        %794 = vst.msk [vmem:[%s257 + $0x38] sm:$0xff] %vm311, %v778
        %795 = vst.msk [vmem:[%s257 + $0x40] sm:$0xff] %vm311, %v779
        %796 = vst.msk [vmem:[%s257 + $0x48] sm:$0xff] %vm311, %v780
        %797 = vst.msk [vmem:[%s257 + $0x50] sm:$0xff] %vm311, %v781
        %798 = vst.msk [vmem:[%s257 + $0x58] sm:$0xff] %vm311, %v782
        %799 = vst.msk [vmem:[%s257 + $0x60] sm:$0xff] %vm311, %v783
        %800 = vst.msk [vmem:[%s257 + $0x68] sm:$0xff] %vm311, %v784
        %801 = vst.msk [vmem:[%s257 + $0x70] sm:$0xff] %vm311, %v785
        %802 = vst.msk [vmem:[%s257 + $0x78] sm:$0xff] %vm311, %v786
        %s803 = sand.u32 %s126, 1
        %s804 = scalar_lea.sflag [#allocation4], %s803
        %s805 = sand.u32 %s126, 1
        %s806 = smul.addr %s805, 128
        %s807 = scalar_lea.vmem [#allocation7], %s806
        // Predicated region
        $region45: #{tpu_custom_call.1} parent=35 // pred_check
          %p808 = pneg %p136
        $region46: #{tpu_custom_call.1} parent=35 // pred_check_branch
          %810 = sbr.rel (%p808) target = $region48
        $region47: #{tpu_custom_call.1} parent=35 // pred_region
          %s811 = smul.u32 4, %s24
          %s813 = ssub.s32 2048, 2048
          %814 = vsyncadd %s804, %s813
          %s815 = smul.addr %s811, 4
          %s816 = smul.addr %s815, 128
          %s817 = scalar_lea.hbm %s4, %s816
          %s818 = sshll.u32 %s807, 4
          %s819 = int_to_ptr.vmem [resolvable:$true] %s818
          %824 = dma.vmem_to_hbm [thread:$0]  %s819, 2048, %s817, %s804, 128, 128, 8
        $region48: #{tpu_custom_call.1} parent=35 // pred_fallthru
          _
      $region36: #{tpu_custom_call.1} parent=5 // pred_fallthru
        _
      %p825 = scmp.le.s32.totalorder 2, %s19
      // Predicated region
      $region49: #{tpu_custom_call.1} parent=5 // pred_check
        %p826 = pneg %p825
      $region50: #{tpu_custom_call.1} parent=5 // pred_check_branch
        %828 = sbr.rel (%p826) target = $region52
      $region51: #{tpu_custom_call.1} parent=5 // pred_region
        %s829 = ssub.s32 %s19, 2
        // Predicated region
        $region53: #{tpu_custom_call.1} parent=51 // pred_check
          %p830 = pneg %p142
        $region54: #{tpu_custom_call.1} parent=51 // pred_check_branch
          %832 = sbr.rel (%p830) target = $region56
        $region55: #{tpu_custom_call.1} parent=51 // pred_region
          %s833 = sand.u32 %s127, 1
          %s834 = scalar_lea.sflag [#allocation4], %s833
          %s835 = sand.u32 %s127, 1
          %s836 = smul.addr %s835, 128
          %s837 = scalar_lea.vmem [#allocation7], %s836
          %838 = dma.done %s834, 2048
        $region56: #{tpu_custom_call.1} parent=51 // pred_fallthru
          _
      $region52: #{tpu_custom_call.1} parent=5 // pred_fallthru
        _
    $region6: #{tpu_custom_call.1} parent=1 // loop_footer
      %s23 = sadd.s32 1, %s19
    $region7: #{tpu_custom_call.1} parent=1 // loop_footer_branch
      %18 = sbr.rel target = $region3
    $region8: #{tpu_custom_call.1} parent=1 // loop_exit
      _
    %839 = vsyncpa [#allocation3], 1
    %s840 = scalar_lea.sflag [#allocation3], 1
    %841 = vsyncpa %s840, 1
    %842 = vsyncpa [#allocation6], 1
    %s843 = scalar_lea.sflag [#allocation6], 1
    %844 = vsyncpa %s843, 1
    %845 = vsyncpa [#allocation4], 1
    %s846 = scalar_lea.sflag [#allocation4], 1
    %847 = vsyncpa %s846, 1

</llo_original>
